<compile_context>
chip_gen: v5e
topology: v5e:2x2
jax: 0.10.0
libtpu: 0.0.40
codegen_flags: <defaults>
</compile_context>

<pallas_src>
import functools
import math

import jax
import jax.numpy as jnp
from jax.experimental import pallas as pl
from jax.experimental.pallas import tpu as pltpu

_LOG2E = 1.4426950408889634
_LN2 = 0.6931471805599453


# --------------------------------------------------------------------------- #
# Kernel 1: LayerNorm (no affine) + adaLN modulate + fused Q/K/V projection
# --------------------------------------------------------------------------- #
def _qkv_kernel(x_ref, mod_ref, w_ref, b_ref, qkv_ref, *, eps):
    x = x_ref[...].astype(jnp.float32)                     # (TN, H)
    mod = mod_ref[...]                                     # (6, H) f32
    shift, scale = mod[0:1], mod[1:2]                      # (1, H)

    mu = jnp.mean(x, axis=-1, keepdims=True)
    var = jnp.mean((x - mu) ** 2, axis=-1, keepdims=True)
    xn = (x - mu) * jax.lax.rsqrt(var + eps)
    xm = (xn * (1.0 + scale) + shift).astype(w_ref.dtype)  # bf16 for the MXU

    # One fused (TN, H) @ (H, 3H) MXU matmul with f32 accumulation; the softmax
    # scale (1/sqrt(hd) * log2(e)) is already folded into the Q columns of w/b.
    qkv = jnp.dot(xm, w_ref[...], preferred_element_type=jnp.float32) + b_ref[...]
    qkv_ref[...] = qkv.astype(qkv_ref.dtype)               # lane-dense (TN, 3H)


# --------------------------------------------------------------------------- #
# Kernel 2: flash attention — grid (batch*head, q-tile); full per-head K/V is
# resident in VMEM and the online softmax loops over KV chunks in-body (no kv
# grid axis -> no per-chunk grid-step overhead).
# --------------------------------------------------------------------------- #
def _flash_kernel(q_ref, k_ref, v_ref, o_ref, *, kv_chunk, num_kv, use_exp2):
    q = q_ref[...]                                         # (TQ, hd) bf16, pre-scaled
    tq, hd = q.shape
    exp = jnp.exp2 if use_exp2 else (lambda z: jnp.exp(z * _LN2))

    def body(i, carry):
        m_prev, l_prev, acc_prev = carry
        start = pl.multiple_of(i * kv_chunk, kv_chunk)
        k = k_ref[pl.ds(start, kv_chunk), :]               # (TK, hd) bf16
        v = v_ref[pl.ds(start, kv_chunk), :]
        s = jax.lax.dot_general(q, k, (((1,), (1,)), ((), ())),
                                preferred_element_type=jnp.float32)  # (TQ, TK) f32
        m_new = jnp.maximum(m_prev, jnp.max(s, axis=-1, keepdims=True))
        alpha = exp(m_prev - m_new)
        p = exp(s - m_new)
        l_new = alpha * l_prev + jnp.sum(p, axis=-1, keepdims=True)
        acc_new = alpha * acc_prev + jnp.dot(p.astype(v.dtype), v,
                                             preferred_element_type=jnp.float32)
        return m_new, l_new, acc_new

    m0 = jnp.full((tq, 1), -jnp.inf, dtype=jnp.float32)
    l0 = jnp.zeros((tq, 1), dtype=jnp.float32)
    a0 = jnp.zeros((tq, hd), dtype=jnp.float32)
    _, l, acc = jax.lax.fori_loop(0, num_kv, body, (m0, l0, a0))
    # Exact divide once per q tile (negligible cost; tighter reference parity
    # than the approximate reciprocal).
    o_ref[...] = (acc * (1.0 / l)).astype(o_ref.dtype)


# --------------------------------------------------------------------------- #
# Kernel 3: attn proj + gated residual + norm2 + modulate + MLP + gated residual
# --------------------------------------------------------------------------- #
def _post_kernel(x_ref, a_ref, mod_ref, wp_ref, bp_ref, w1_ref, b1_ref,
                 w2_ref, b2_ref, o_ref, *, eps, gelu_approx):
    x = x_ref[...].astype(jnp.float32)                     # (TN, H) residual stream
    a = a_ref[...]                                         # (TN, H) bf16 attention
    mod = mod_ref[...]                                     # (6, H) f32
    g_msa, sh_mlp, sc_mlp, g_mlp = mod[2:3], mod[3:4], mod[4:5], mod[5:6]

    attn = jnp.dot(a, wp_ref[...], preferred_element_type=jnp.float32) + bp_ref[...]
    x1 = x + g_msa * attn                                  # gated residual 1

    mu = jnp.mean(x1, axis=-1, keepdims=True)
    var = jnp.mean((x1 - mu) ** 2, axis=-1, keepdims=True)
    xn = (x1 - mu) * jax.lax.rsqrt(var + eps)
    xm = xn * (1.0 + sc_mlp) + sh_mlp

    h1 = jnp.dot(xm.astype(w1_ref.dtype), w1_ref[...],
                 preferred_element_type=jnp.float32) + b1_ref[...]
    h1 = jax.nn.gelu(h1, approximate=gelu_approx)          # exact erf = nn.GELU()
    h2 = jnp.dot(h1.astype(w2_ref.dtype), w2_ref[...],
                 preferred_element_type=jnp.float32) + b2_ref[...]

    o_ref[...] = (x1 + g_mlp * h2).astype(o_ref.dtype)     # gated residual 2


# ------------------------------- Helpers ------------------------------------ #
def _nb(shape, itemsize):
    return math.prod(shape) * itemsize


def _vmem_cap_bytes():
    """Generation-aware scoped-VMEM cap (~56 MiB on v7x, ~100 MiB on v5e/v6e)."""
    phys = 64 << 20                                        # conservative (v7x)
    try:
        phys = int(pltpu.get_tpu_info().vmem_capacity_bytes)
    except Exception:
        pass
    return min(phys - (8 << 20), 100 << 20)


def _compiler_params(dims, need_bytes, cap):
    limit = int(min(max(need_bytes + (8 << 20), 32 << 20), cap))
    return pltpu.CompilerParams(dimension_semantics=dims, vmem_limit_bytes=limit)


def _qkv_need(tn, H, wbufs=1):
    act = 2 * (_nb((tn, H), 4) + _nb((8, H), 4) + _nb((tn, 3 * H), 2))
    wts = wbufs * (_nb((H, 3 * H), 2) + _nb((8, 3 * H), 4))
    inter = _nb((tn, 3 * H), 4) + 3 * _nb((tn, H), 4)
    return act + wts + inter


def _post_need(tn, H, Hm, wbufs=1):
    act = 2 * (2 * _nb((tn, H), 4) + _nb((tn, H), 2) + _nb((8, H), 4))
    wts = wbufs * (_nb((H, H), 2) + _nb((H, Hm), 2) + _nb((Hm, H), 2)
                   + 2 * _nb((8, H), 4) + _nb((8, Hm), 4))
    inter = 2 * _nb((tn, Hm), 4) + 4 * _nb((tn, H), 4)     # f32 GELU intermediates
    return act + wts + inter


def _flash_need(tq, tk, n, hd):
    act = 2 * (2 * _nb((tq, hd), 2)) + 2 * (2 * _nb((n, hd), 2))
    inter = 2 * _nb((tq, tk), 4) + 2 * _nb((tq, hd), 4)
    return act + inter


def _divisor_tiles(n, max_tile):
    """Candidate seq tiles: divisors of n that are multiples of 8, descending."""
    ts = [t for t in range(min(n, max_tile), 7, -1) if n % t == 0 and t % 8 == 0]
    if n <= max_tile and n not in ts:
        ts = [n] + ts
    # TODO(synk): pad N to a multiple of 8/128 (and mask) instead of falling
    # back to a full-length tile when N has no suitable divisor.
    return ts or [n]


def _choose_tile(n, batch, preferred, need_fn, budget):
    """Largest tile that fits the VMEM budget; prefer >=2 parallel grid steps
    (v7x megacore) when a fitting tile allows it."""
    cands = _divisor_tiles(n, preferred)
    fallback = None
    for t in cands:
        if need_fn(t) > budget:
            continue
        if batch * (n // t) >= 2:
            return t
        if fallback is None:
            fallback = t
    return fallback if fallback is not None else cands[-1]


def _weight_spec(shape, single_buffer):
    """Grid-invariant weight/bias: never re-fetched, so one VMEM buffer suffices."""
    index_map = lambda b, n: (0,) * len(shape)
    if single_buffer:
        return pl.BlockSpec(shape, index_map, pipeline_mode=pl.Buffered(1))
    return pl.BlockSpec(shape, index_map)


def _first_that_works(build_and_call, options):
    """Run the most aggressive kernel variant this jax/Mosaic build accepts.

    Used for (a) single- vs double-buffered grid-invariant weights and
    (b) exp2 vs exp softmax; all variants are numerically equivalent."""
    for opt in options[:-1]:
        try:
            return build_and_call(opt)
        except Exception:
            pass
    return build_and_call(options[-1])


# ------------------------------- Wrapper ------------------------------------ #
def dit_block(x, c, params, *, num_heads, eps=1e-6, compute_dtype=jnp.bfloat16,
              gelu_approx=False):
    """x: (B, N, H) f32, c: (B, H) f32.  Returns (B, N, H) f32."""
    B, N, H = x.shape
    assert H % num_heads == 0, "hidden size must be divisible by num_heads"
    hd = H // num_heads
    Hm = params["w_fc1"].shape[1]

    cap = _vmem_cap_bytes()
    budget = cap - (8 << 20)

    # adaLN modulation (tiny M=B matmul) stays in XLA; packed as one (B, 6, H)
    # tensor: [shift_msa, scale_msa, gate_msa, shift_mlp, scale_mlp, gate_mlp].
    mod = (jax.nn.silu(c) @ params["w_ada"] + params["b_ada"][0]).reshape(B, 6, H)

    # Softmax scale (in log2 domain) folded into the Q columns; Q/K/V fused.
    qscale = _LOG2E / math.sqrt(hd)
    w_qkv = params["w_qkv"].at[:, :H].multiply(qscale).astype(compute_dtype)
    b_qkv = params["b_qkv"].at[:, :H].multiply(qscale)
    wp = params["w_proj"].astype(compute_dtype)
    w1 = params["w_fc1"].astype(compute_dtype)
    w2 = params["w_fc2"].astype(compute_dtype)
    bp, b1, b2 = params["b_proj"], params["b_fc1"], params["b_fc2"]

    xseq = lambda tn: pl.BlockSpec((None, tn, H), lambda b, n: (b, n, 0))
    qkvseq = lambda tn: pl.BlockSpec((None, tn, 3 * H), lambda b, n: (b, n, 0))
    modspec = pl.BlockSpec((None, 6, H), lambda b, n: (b, 0, 0))

    # ---------------- Kernel 1: norm1 + modulate + fused QKV ---------------- #
    tn1 = _choose_tile(N, B, 256, lambda t: _qkv_need(t, H), budget)

    def qkv_call(single_buffer):
        wspec = lambda s: _weight_spec(s, single_buffer)
        return pl.pallas_call(
            functools.partial(_qkv_kernel, eps=eps),
            out_shape=jax.ShapeDtypeStruct((B, N, 3 * H), compute_dtype),
            grid_spec=pltpu.PrefetchScalarGridSpec(
                num_scalar_prefetch=0,
                grid=(B, N // tn1),
                in_specs=[xseq(tn1), modspec,
                          wspec((H, 3 * H)), wspec((1, 3 * H))],
                out_specs=qkvseq(tn1),
            ),
            compiler_params=_compiler_params(
                ("parallel", "parallel"), _qkv_need(tn1, H, wbufs=2), cap),
        )(x, mod, w_qkv, b_qkv)

    qkv = _first_that_works(qkv_call, (True, False))

    # Head split: one XLA reshape/transpose for q, k and v together.
    # TODO(synk): fusing the head split/merge into kernels 1/3 needs either
    # in-kernel major-dim transposes or hd-deep per-head proj matmuls; neither
    # is clearly profitable, so they stay as plain XLA transposes.
    qkv = qkv.reshape(B, N, 3, num_heads, hd).transpose(2, 0, 3, 1, 4)
    qkv = qkv.reshape(3, B * num_heads, N, hd)
    qh, kh, vh = qkv[0], qkv[1], qkv[2]

    # ---------------- Kernel 2: flash attention ---------------- #
    tq = _divisor_tiles(N, 256)[0]
    tk = _divisor_tiles(N, 512)[0]

    def flash_call(use_exp2):
        return pl.pallas_call(
            functools.partial(_flash_kernel, kv_chunk=tk, num_kv=N // tk,
                              use_exp2=use_exp2),
            out_shape=jax.ShapeDtypeStruct((B * num_heads, N, hd), compute_dtype),
            grid_spec=pltpu.PrefetchScalarGridSpec(
                num_scalar_prefetch=0,
                grid=(B * num_heads, N // tq),
                in_specs=[
                    pl.BlockSpec((None, tq, hd), lambda bh, qi: (bh, qi, 0)),
                    pl.BlockSpec((None, N, hd), lambda bh, qi: (bh, 0, 0)),
                    pl.BlockSpec((None, N, hd), lambda bh, qi: (bh, 0, 0)),
                ],
                out_specs=pl.BlockSpec((None, tq, hd), lambda bh, qi: (bh, qi, 0)),
            ),
            compiler_params=_compiler_params(
                ("parallel", "parallel"), _flash_need(tq, tk, N, hd), cap),
        )(qh, kh, vh)

    attn = _first_that_works(flash_call, (True, False))
    attn = attn.reshape(B, num_heads, N, hd).transpose(0, 2, 1, 3).reshape(B, N, H)

    # ------ Kernel 3: proj + residual + norm2 + modulate + MLP + residual ------ #
    tn3 = _choose_tile(N, B, 256, lambda t: _post_need(t, H, Hm), budget)

    def post_call(single_buffer):
        wspec = lambda s: _weight_spec(s, single_buffer)
        return pl.pallas_call(
            functools.partial(_post_kernel, eps=eps, gelu_approx=gelu_approx),
            out_shape=jax.ShapeDtypeStruct((B, N, H), x.dtype),
            grid_spec=pltpu.PrefetchScalarGridSpec(
                num_scalar_prefetch=0,
                grid=(B, N // tn3),
                in_specs=[
                    xseq(tn3),                              # residual stream (f32)
                    xseq(tn3),                              # attention output (bf16)
                    modspec,
                    wspec((H, H)), wspec((1, H)),           # attn proj
                    wspec((H, Hm)), wspec((1, Hm)),         # fc1
                    wspec((Hm, H)), wspec((1, H)),          # fc2
                ],
                out_specs=xseq(tn3),
            ),
            compiler_params=_compiler_params(
                ("parallel", "parallel"), _post_need(tn3, H, Hm, wbufs=2), cap),
        )(x, attn, mod, wp, bp, w1, b1, w2, b2)

    return _first_that_works(post_call, (True, False))


# --------------------------- Pure-JAX reference ----------------------------- #
def dit_block_ref(x, c, params, *, num_heads, eps=1e-6):
    B, N, H = x.shape
    hd = H // num_heads

    def ln(z):
        mu = jnp.mean(z, axis=-1, keepdims=True)
        var = jnp.mean((z - mu) ** 2, axis=-1, keepdims=True)
        return (z - mu) * jax.lax.rsqrt(var + eps)

    mod = jax.nn.silu(c) @ params["w_ada"] + params["b_ada"][0]          # (B, 6H)
    sh_a, sc_a, g_a, sh_m, sc_m, g_m = jnp.split(mod, 6, axis=1)

    xm = ln(x) * (1.0 + sc_a[:, None, :]) + sh_a[:, None, :]
    qkv = xm @ params["w_qkv"] + params["b_qkv"][0]                      # (B, N, 3H)
    qkv = qkv.reshape(B, N, 3, num_heads, hd).transpose(2, 0, 3, 1, 4)
    q, k, v = qkv[0], qkv[1], qkv[2]                                     # (B, h, N, hd)
    s = jnp.einsum("bhnd,bhmd->bhnm", q, k) / math.sqrt(hd)
    p = jax.nn.softmax(s, axis=-1)
    o = jnp.einsum("bhnm,bhmd->bhnd", p, v).transpose(0, 2, 1, 3).reshape(B, N, H)
    attn_out = o @ params["w_proj"] + params["b_proj"][0]
    x1 = x + g_a[:, None, :] * attn_out

    xm2 = ln(x1) * (1.0 + sc_m[:, None, :]) + sh_m[:, None, :]
    h1 = jax.nn.gelu(xm2 @ params["w_fc1"] + params["b_fc1"][0], approximate=False)
    h2 = h1 @ params["w_fc2"] + params["b_fc2"][0]
    return x1 + g_m[:, None, :] * h2


# --------------------------------- Main -------------------------------------- #
if __name__ == "__main__":
    B, N, H = 2, 8, 32
    num_heads = 4
    mlp_ratio = 4.0
    Hm = int(H * mlp_ratio)

    key = jax.random.PRNGKey(0)
    ks = jax.random.split(key, 12)
    init = lambda k, shape, s=0.05: (s * jax.random.normal(k, shape)).astype(jnp.float32)

    # Weights stored pre-transposed as (in, out); biases as (1, out).
    params = {
        "w_ada":  init(ks[0], (H, 6 * H)),
        "b_ada":  init(ks[1], (1, 6 * H)),
        "w_qkv":  init(ks[2], (H, 3 * H)),
        "b_qkv":  init(ks[3], (1, 3 * H)),
        "w_proj": init(ks[4], (H, H)),
        "b_proj": init(ks[5], (1, H)),
        "w_fc1":  init(ks[6], (H, Hm)),
        "b_fc1":  init(ks[7], (1, Hm)),
        "w_fc2":  init(ks[8], (Hm, H)),
        "b_fc2":  init(ks[9], (1, H)),
    }

    x = jax.random.normal(ks[10], (B, N, H), dtype=jnp.float32)
    c = jax.random.normal(ks[11], (B, H), dtype=jnp.float32)

    out = dit_block(x, c, params, num_heads=num_heads)
    out = jax.block_until_ready(out)

    ref = dit_block_ref(x, c, params, num_heads=num_heads)
    assert out.shape == (B, N, H)
    err = jnp.max(jnp.abs(out - ref))
    # bf16 MXU matmuls -> relaxed (but tight for these scales) tolerance.
    assert jnp.allclose(out, ref, atol=2e-2, rtol=2e-2), f"max abs err = {err}"

    print("KERNEL_OK")
</pallas_src>

<mosaic_0001>
module attributes {stable_mosaic.version = 11 : i64} {
  func.func @_qkv_kernel(%arg0: i32, %arg1: i32, %arg2: memref<1x8x32xf32, #tpu.memory_space<vmem>>, %arg3: memref<1x6x32xf32, #tpu.memory_space<vmem>>, %arg4: memref<32x96xbf16, #tpu.memory_space<vmem>>, %arg5: memref<1x96xf32, #tpu.memory_space<vmem>>, %arg6: memref<1x8x96xbf16, #tpu.memory_space<vmem>>) attributes {dimension_semantics = [#tpu.dimension_semantics<parallel>, #tpu.dimension_semantics<parallel>], iteration_bounds = array<i64: 2, 1>, scalar_prefetch = 0 : i64, scratch_operands = 0 : i64, tpu.core_type = #tpu.core_type<tc>, window_params = [{transform_indices = @transform_0, window_bounds = array<i64: 1, 8, 32>}, {transform_indices = @transform_1, window_bounds = array<i64: 1, 6, 32>}, {pipeline_mode = #tpu.pipeline_mode<synchronous>, transform_indices = @transform_2, window_bounds = array<i64: 32, 96>}, {pipeline_mode = #tpu.pipeline_mode<synchronous>, transform_indices = @transform_3, window_bounds = array<i64: 1, 96>}, {transform_indices = @transform_4, window_bounds = array<i64: 1, 8, 96>}]} {
    %c0 = arith.constant 0 : index
    %c0_0 = arith.constant 0 : index
    %c0_1 = arith.constant 0 : index
    %0 = vector.load %arg2[%c0, %c0_0, %c0_1] : memref<1x8x32xf32, #tpu.memory_space<vmem>>, vector<1x8x32xf32>
    %1 = vector.shape_cast %0 : vector<1x8x32xf32> to vector<8x32xf32>
    %c0_2 = arith.constant 0 : index
    %c0_3 = arith.constant 0 : index
    %c0_4 = arith.constant 0 : index
    %2 = vector.load %arg3[%c0_2, %c0_3, %c0_4] : memref<1x6x32xf32, #tpu.memory_space<vmem>>, vector<1x6x32xf32>
    %3 = vector.shape_cast %2 : vector<1x6x32xf32> to vector<6x32xf32>
    %4 = vector.extract_strided_slice %3 {offsets = [0, 0], sizes = [1, 32], strides = [1, 1]} : vector<6x32xf32> to vector<1x32xf32>
    %5 = vector.extract_strided_slice %3 {offsets = [1, 0], sizes = [1, 32], strides = [1, 1]} : vector<6x32xf32> to vector<1x32xf32>
    %cst = arith.constant dense<0.000000e+00> : vector<8xf32>
    %6 = vector.multi_reduction <add>, %1, %cst [1] : vector<8x32xf32> to vector<8xf32>
    %7 = vector.shape_cast %6 : vector<8xf32> to vector<8x1xf32>
    %cst_5 = arith.constant 3.200000e+01 : f32
    %8 = vector.broadcast %cst_5 : f32 to vector<8x1xf32>
    %9 = arith.divf %7, %8 : vector<8x1xf32>
    %10 = vector.broadcast %9 : vector<8x1xf32> to vector<8x32xf32>
    %11 = arith.subf %1, %10 : vector<8x32xf32>
    %12 = arith.mulf %11, %11 : vector<8x32xf32>
    %cst_6 = arith.constant dense<0.000000e+00> : vector<8xf32>
    %13 = vector.multi_reduction <add>, %12, %cst_6 [1] : vector<8x32xf32> to vector<8xf32>
    %14 = vector.shape_cast %13 : vector<8xf32> to vector<8x1xf32>
    %cst_7 = arith.constant 3.200000e+01 : f32
    %15 = vector.broadcast %cst_7 : f32 to vector<8x1xf32>
    %16 = arith.divf %14, %15 : vector<8x1xf32>
    %17 = vector.broadcast %9 : vector<8x1xf32> to vector<8x32xf32>
    %18 = arith.subf %1, %17 : vector<8x32xf32>
    %cst_8 = arith.constant 9.99999997E-7 : f32
    %19 = vector.broadcast %cst_8 : f32 to vector<8x1xf32>
    %20 = arith.addf %16, %19 : vector<8x1xf32>
    %21 = math.rsqrt %20 : vector<8x1xf32>
    %22 = vector.broadcast %21 : vector<8x1xf32> to vector<8x32xf32>
    %23 = arith.mulf %18, %22 : vector<8x32xf32>
    %cst_9 = arith.constant 1.000000e+00 : f32
    %24 = vector.broadcast %cst_9 : f32 to vector<1x32xf32>
    %25 = arith.addf %24, %5 : vector<1x32xf32>
    %26 = vector.broadcast %25 : vector<1x32xf32> to vector<8x32xf32>
    %27 = arith.mulf %23, %26 : vector<8x32xf32>
    %28 = vector.broadcast %4 : vector<1x32xf32> to vector<8x32xf32>
    %29 = arith.addf %27, %28 : vector<8x32xf32>
    %30 = arith.truncf %29 : vector<8x32xf32> to vector<8x32xbf16>
    %c0_10 = arith.constant 0 : index
    %c0_11 = arith.constant 0 : index
    %31 = vector.load %arg4[%c0_10, %c0_11] : memref<32x96xbf16, #tpu.memory_space<vmem>>, vector<32x96xbf16>
    %cst_12 = arith.constant dense<0.000000e+00> : vector<8x96xf32>
    %32 = tpu.matmul %30, %31, %cst_12 {dimension_numbers = #tpu.dot_dimension_numbers<[1], [0], [0], [1], [0, 0, 1, 1], [], []>} : vector<8x32xbf16>, vector<32x96xbf16>, vector<8x96xf32> -> vector<8x96xf32>
    %c0_13 = arith.constant 0 : index
    %c0_14 = arith.constant 0 : index
    %33 = vector.load %arg5[%c0_13, %c0_14] : memref<1x96xf32, #tpu.memory_space<vmem>>, vector<1x96xf32>
    %34 = vector.broadcast %33 : vector<1x96xf32> to vector<8x96xf32>
    %35 = arith.addf %32, %34 : vector<8x96xf32>
    %36 = arith.truncf %35 : vector<8x96xf32> to vector<8x96xbf16>
    %c0_15 = arith.constant 0 : index
    %c0_16 = arith.constant 0 : index
    %c0_17 = arith.constant 0 : index
    %37 = vector.load %arg6[%c0_15, %c0_16, %c0_17] : memref<1x8x96xbf16, #tpu.memory_space<vmem>>, vector<1x8x96xbf16>
    %38 = vector.shape_cast %37 : vector<1x8x96xbf16> to vector<8x96xbf16>
    %39 = vector.shape_cast %36 : vector<8x96xbf16> to vector<1x8x96xbf16>
    tpu.vector_store %arg6[%c0_15, %c0_16, %c0_17], %39 {strides = array<i32>} : memref<1x8x96xbf16, #tpu.memory_space<vmem>>, vector<1x8x96xbf16>,
    return
  }
  func.func @transform_0(%arg0: i32, %arg1: i32) -> (i32, i32, i32) {
    %c0_i32 = arith.constant 0 : i32
    %c0_i32_0 = arith.constant 0 : i32
    return %arg0, %arg1, %c0_i32 : i32, i32, i32
  }
  func.func @transform_1(%arg0: i32, %arg1: i32) -> (i32, i32, i32) {
    %c0_i32 = arith.constant 0 : i32
    %c0_i32_0 = arith.constant 0 : i32
    %c0_i32_1 = arith.constant 0 : i32
    return %arg0, %c0_i32, %c0_i32_0 : i32, i32, i32
  }
  func.func @transform_2(%arg0: i32, %arg1: i32) -> (i32, i32) {
    %c0_i32 = arith.constant 0 : i32
    %c0_i32_0 = arith.constant 0 : i32
    %c0_i32_1 = arith.constant 0 : i32
    return %c0_i32, %c0_i32_0 : i32, i32
  }
  func.func @transform_3(%arg0: i32, %arg1: i32) -> (i32, i32) {
    %c0_i32 = arith.constant 0 : i32
    %c0_i32_0 = arith.constant 0 : i32
    %c0_i32_1 = arith.constant 0 : i32
    return %c0_i32, %c0_i32_0 : i32, i32
  }
  func.func @transform_4(%arg0: i32, %arg1: i32) -> (i32, i32, i32) {
    %c0_i32 = arith.constant 0 : i32
    %c0_i32_0 = arith.constant 0 : i32
    return %arg0, %arg1, %c0_i32 : i32, i32, i32
  }
}

module attributes {stable_mosaic.version = 11 : i64} {
  func.func @_qkv_kernel(%arg0: i32, %arg1: i32, %arg2: memref<1x8x32xf32, #tpu.memory_space<vmem>>, %arg3: memref<1x6x32xf32, #tpu.memory_space<vmem>>, %arg4: memref<32x96xbf16, #tpu.memory_space<vmem>>, %arg5: memref<1x96xf32, #tpu.memory_space<vmem>>, %arg6: memref<1x8x96xbf16, #tpu.memory_space<vmem>>) attributes {dimension_semantics = [#tpu.dimension_semantics<parallel>, #tpu.dimension_semantics<parallel>], iteration_bounds = array<i64: 2, 1>, scalar_prefetch = 0 : i64, scratch_operands = 0 : i64, tpu.core_type = #tpu.core_type<tc>, window_params = [{transform_indices = @transform_0, window_bounds = array<i64: 1, 8, 32>}, {transform_indices = @transform_1, window_bounds = array<i64: 1, 6, 32>}, {pipeline_mode = #tpu.pipeline_mode<synchronous>, transform_indices = @transform_2, window_bounds = array<i64: 32, 96>}, {pipeline_mode = #tpu.pipeline_mode<synchronous>, transform_indices = @transform_3, window_bounds = array<i64: 1, 96>}, {transform_indices = @transform_4, window_bounds = array<i64: 1, 8, 96>}]} {
    %c0 = arith.constant 0 : index
    %c0_0 = arith.constant 0 : index
    %c0_1 = arith.constant 0 : index
    %0 = vector.load %arg2[%c0, %c0_0, %c0_1] : memref<1x8x32xf32, #tpu.memory_space<vmem>>, vector<1x8x32xf32>
    %1 = vector.shape_cast %0 : vector<1x8x32xf32> to vector<8x32xf32>
    %c0_2 = arith.constant 0 : index
    %c0_3 = arith.constant 0 : index
    %c0_4 = arith.constant 0 : index
    %2 = vector.load %arg3[%c0_2, %c0_3, %c0_4] : memref<1x6x32xf32, #tpu.memory_space<vmem>>, vector<1x6x32xf32>
    %3 = vector.shape_cast %2 : vector<1x6x32xf32> to vector<6x32xf32>
    %4 = vector.extract_strided_slice %3 {offsets = [0, 0], sizes = [1, 32], strides = [1, 1]} : vector<6x32xf32> to vector<1x32xf32>
    %5 = vector.extract_strided_slice %3 {offsets = [1, 0], sizes = [1, 32], strides = [1, 1]} : vector<6x32xf32> to vector<1x32xf32>
    %cst = arith.constant dense<0.000000e+00> : vector<8xf32>
    %6 = vector.multi_reduction <add>, %1, %cst [1] : vector<8x32xf32> to vector<8xf32>
    %7 = vector.shape_cast %6 : vector<8xf32> to vector<8x1xf32>
    %cst_5 = arith.constant 3.200000e+01 : f32
    %8 = vector.broadcast %cst_5 : f32 to vector<8x1xf32>
    %9 = arith.divf %7, %8 : vector<8x1xf32>
    %10 = vector.broadcast %9 : vector<8x1xf32> to vector<8x32xf32>
    %11 = arith.subf %1, %10 : vector<8x32xf32>
    %12 = arith.mulf %11, %11 : vector<8x32xf32>
    %cst_6 = arith.constant dense<0.000000e+00> : vector<8xf32>
    %13 = vector.multi_reduction <add>, %12, %cst_6 [1] : vector<8x32xf32> to vector<8xf32>
    %14 = vector.shape_cast %13 : vector<8xf32> to vector<8x1xf32>
    %cst_7 = arith.constant 3.200000e+01 : f32
    %15 = vector.broadcast %cst_7 : f32 to vector<8x1xf32>
    %16 = arith.divf %14, %15 : vector<8x1xf32>
    %17 = vector.broadcast %9 : vector<8x1xf32> to vector<8x32xf32>
    %18 = arith.subf %1, %17 : vector<8x32xf32>
    %cst_8 = arith.constant 9.99999997E-7 : f32
    %19 = vector.broadcast %cst_8 : f32 to vector<8x1xf32>
    %20 = arith.addf %16, %19 : vector<8x1xf32>
    %21 = math.rsqrt %20 : vector<8x1xf32>
    %22 = vector.broadcast %21 : vector<8x1xf32> to vector<8x32xf32>
    %23 = arith.mulf %18, %22 : vector<8x32xf32>
    %cst_9 = arith.constant 1.000000e+00 : f32
    %24 = vector.broadcast %cst_9 : f32 to vector<1x32xf32>
    %25 = arith.addf %24, %5 : vector<1x32xf32>
    %26 = vector.broadcast %25 : vector<1x32xf32> to vector<8x32xf32>
    %27 = arith.mulf %23, %26 : vector<8x32xf32>
    %28 = vector.broadcast %4 : vector<1x32xf32> to vector<8x32xf32>
    %29 = arith.addf %27, %28 : vector<8x32xf32>
    %30 = arith.truncf %29 : vector<8x32xf32> to vector<8x32xbf16>
    %c0_10 = arith.constant 0 : index
    %c0_11 = arith.constant 0 : index
    %31 = vector.load %arg4[%c0_10, %c0_11] : memref<32x96xbf16, #tpu.memory_space<vmem>>, vector<32x96xbf16>
    %cst_12 = arith.constant dense<0.000000e+00> : vector<8x96xf32>
    %32 = tpu.matmul %30, %31, %cst_12 {dimension_numbers = #tpu.dot_dimension_numbers<[1], [0], [0], [1], [0, 0, 1, 1], [], []>} : vector<8x32xbf16>, vector<32x96xbf16>, vector<8x96xf32> -> vector<8x96xf32>
    %c0_13 = arith.constant 0 : index
    %c0_14 = arith.constant 0 : index
    %33 = vector.load %arg5[%c0_13, %c0_14] : memref<1x96xf32, #tpu.memory_space<vmem>>, vector<1x96xf32>
    %34 = vector.broadcast %33 : vector<1x96xf32> to vector<8x96xf32>
    %35 = arith.addf %32, %34 : vector<8x96xf32>
    %36 = arith.truncf %35 : vector<8x96xf32> to vector<8x96xbf16>
    %c0_15 = arith.constant 0 : index
    %c0_16 = arith.constant 0 : index
    %c0_17 = arith.constant 0 : index
    %37 = vector.load %arg6[%c0_15, %c0_16, %c0_17] : memref<1x8x96xbf16, #tpu.memory_space<vmem>>, vector<1x8x96xbf16>
    %38 = vector.shape_cast %37 : vector<1x8x96xbf16> to vector<8x96xbf16>
    %39 = vector.shape_cast %36 : vector<8x96xbf16> to vector<1x8x96xbf16>
    tpu.vector_store %arg6[%c0_15, %c0_16, %c0_17], %39 {strides = array<i32>} : memref<1x8x96xbf16, #tpu.memory_space<vmem>>, vector<1x8x96xbf16>,
    return
  }
  func.func @transform_0(%arg0: i32, %arg1: i32) -> (i32, i32, i32) {
    %c0_i32 = arith.constant 0 : i32
    %c0_i32_0 = arith.constant 0 : i32
    return %arg0, %arg1, %c0_i32 : i32, i32, i32
  }
  func.func @transform_1(%arg0: i32, %arg1: i32) -> (i32, i32, i32) {
    %c0_i32 = arith.constant 0 : i32
    %c0_i32_0 = arith.constant 0 : i32
    %c0_i32_1 = arith.constant 0 : i32
    return %arg0, %c0_i32, %c0_i32_0 : i32, i32, i32
  }
  func.func @transform_2(%arg0: i32, %arg1: i32) -> (i32, i32) {
    %c0_i32 = arith.constant 0 : i32
    %c0_i32_0 = arith.constant 0 : i32
    %c0_i32_1 = arith.constant 0 : i32
    return %c0_i32, %c0_i32_0 : i32, i32
  }
  func.func @transform_3(%arg0: i32, %arg1: i32) -> (i32, i32) {
    %c0_i32 = arith.constant 0 : i32
    %c0_i32_0 = arith.constant 0 : i32
    %c0_i32_1 = arith.constant 0 : i32
    return %c0_i32, %c0_i32_0 : i32, i32
  }
  func.func @transform_4(%arg0: i32, %arg1: i32) -> (i32, i32, i32) {
    %c0_i32 = arith.constant 0 : i32
    %c0_i32_0 = arith.constant 0 : i32
    return %arg0, %arg1, %c0_i32 : i32, i32, i32
  }
}

</mosaic_0001>

<llo_original>
// kernel: tpu_custom_call.1
$region0: #{tpu_custom_call.1}
  #allocation0 [shape = 'u32[]', space=smem, size = 0x4, offset = 0x4, fixed_abs, tag = 'smem constant byte address 0x4 - core index']
  #allocation1 [shape = 'u32[72,128]{1,0:T(1,128)}', space=vmem, size = 0x9000, scoped, tag = 'internal scratch']
  %s0 = inlined_call_operand.vmem [shape: f32[2,8,32], index: 0, kind: input, shape index: {}]
  %s1 = inlined_call_operand.vmem [shape: f32[2,6,32], index: 1, kind: input, shape index: {}]
  %s2 = inlined_call_operand.hbm [shape: bf16[32,96], index: 2, kind: input, shape index: {}]
  %s3 = inlined_call_operand.vmem [shape: f32[1,96], index: 3, kind: input, shape index: {}]
  %s4 = inlined_call_operand.hbm [shape: bf16[2,8,96], index: 4, kind: output, shape index: {}]
  %s5 = sld [smem:[#allocation0]]
  $region53: #{tpu_custom_call.1} parent=0
    _
  %s7 = ssub.s32 1, %s5
  %s8 = scalar_select 0, %s7, %s5
  $region1: #{tpu_custom_call.1} parent=0
    #allocation2 [shape = 'u8[8192]{0}', space=vmem, size = 0x2000, scoped, tag = 'input window, operand 2, single buffered']
    #allocation3 [shape = 's32[2]{0}', space=sflag, size = 0x8, scoped, tag = 'scoped memory for tpu_custom_call.1']
    #allocation4 [shape = 's32[2]{0}', space=sflag, size = 0x8, scoped, tag = 'scoped memory for tpu_custom_call.1']
    #allocation5 [shape = 'u8[4096]{0}', space=vmem, size = 0x1000, scoped, tag = 'output window, operand 0']
    %9 = vsyncpa [#allocation3], 0
    %10 = vsyncpa [#allocation4], 0
    %s11 = scalar_lea.sflag [#allocation4], 1
    %12 = vsyncpa %s11, 0
    loop: start=0, step=1, limit=4
    $region2: #{tpu_custom_call.1} parent=1 // loop_pre_header
      _
    $region3: #{tpu_custom_call.1} parent=1 // loop_header
      %s14 = sphi 0, %s18
      %p15 = scmp.ge.s32.totalorder %s14, 4
      %s21 = sphi 0, %s33
      %s22 = sphi 0, %s29
      %s23 = sphi 0, %s21
      %s24 = sphi 0, %s22
      %s25 = sphi 0, %s23
      %s26 = sphi 0, %s24
      %s38 = sphi 0, %s40
      %s41 = sphi 0, %s38
      %s42 = sphi 0, %s41
      %s58 = sphi 0, %s42
      %s64 = sphi 0, %s66
      %s67 = sphi 0, %s64
      %s68 = sphi 0, %s67
      %s84 = sphi 0, %s68
      %s88 = sphi 0, %s88
      %s90 = sphi 0, %s88
      %s91 = sphi 0, %s90
      %s105 = sphi 0, %s91
      %s109 = sphi 0, %s109
      %s111 = sphi 0, %s109
      %s112 = sphi 0, %s111
      %s126 = sphi 0, %s112
      %s134 = sphi 0, %s136
      %s137 = sphi 0, %s134
      %s138 = sphi 0, %s137
      %s154 = sphi 0, %s138
    $region4: #{tpu_custom_call.1} parent=1 // loop_header_branch
      %17 = sbr.rel (%p15) target = $region8
    $region5: #{tpu_custom_call.1} parent=1 // loop_body
      %s19 = ssub.s32 %s14, 1
      %s20 = ssub.s32 %s14, 2
      %s27 = sadd.s32 1, %s22
      %p28 = scmp.ge.s32.totalorder %s27, 1
      %s29 = scalar_select %p28, 0, %s27
      %s30 = sadd.s32 1, %s21
      %s31 = scalar_select %p28, %s30, %s21
      %p32 = scmp.ge.s32.totalorder %s31, 2
      %s33 = scalar_select %p32, 0, %s31
      %s34 = ssub.s32 %s21, %s33
      %s35 = ssub.s32 %s22, %s29
      %s36 = sor.u32 %s34, %s35
      %p37 = scmp.eq.s32.totalorder %s36, 0
      %s39 = sadd.s32 %s38, 1
      %s40 = scalar_select %p37, %s38, %s39
      %p43 = pneg %p37
      %p44 = scmp.eq.s32.totalorder %s14, 1
      %p45 = por %p43, %p44
      %p46 = scmp.ne.s32.totalorder %s38, %s41
      %p47 = scmp.eq.s32.totalorder %s14, 0
      %p48 = por %p46, %p47
      %p49 = scmp.ne.s32.totalorder %s38, %s41
      %p50 = scmp.eq.s32.totalorder %s19, 1
      %p51 = por %p49, %p50
      %p52 = scmp.ne.s32.totalorder %s41, %s42
      %p53 = scmp.eq.s32.totalorder %s19, 0
      %p54 = por %p52, %p53
      %p55 = scmp.ne.s32.totalorder %s41, %s42
      %p56 = scmp.eq.s32.totalorder %s20, 1
      %p57 = por %p55, %p56
      %p59 = scmp.ne.s32.totalorder %s42, %s58
      %p60 = scmp.eq.s32.totalorder %s20, 0
      %p61 = por %p59, %p60
      %s62 = ssub.s32 %s21, %s33
      %p63 = scmp.eq.s32.totalorder %s62, 0
      %s65 = sadd.s32 %s64, 1
      %s66 = scalar_select %p63, %s64, %s65
      %p69 = pneg %p63
      %p70 = scmp.eq.s32.totalorder %s14, 1
      %p71 = por %p69, %p70
      %p72 = scmp.ne.s32.totalorder %s64, %s67
      %p73 = scmp.eq.s32.totalorder %s14, 0
      %p74 = por %p72, %p73
      %p75 = scmp.ne.s32.totalorder %s64, %s67
      %p76 = scmp.eq.s32.totalorder %s19, 1
      %p77 = por %p75, %p76
      %p78 = scmp.ne.s32.totalorder %s67, %s68
      %p79 = scmp.eq.s32.totalorder %s19, 0
      %p80 = por %p78, %p79
      %p81 = scmp.ne.s32.totalorder %s67, %s68
      %p82 = scmp.eq.s32.totalorder %s20, 1
      %p83 = por %p81, %p82
      %p85 = scmp.ne.s32.totalorder %s68, %s84
      %p86 = scmp.eq.s32.totalorder %s20, 0
      %p87 = por %p85, %p86
      %s89 = sadd.s32 %s88, 1
      %p92 = scmp.eq.s32.totalorder %s14, 1
      %p93 = scmp.ne.s32.totalorder %s88, %s90
      %p94 = scmp.eq.s32.totalorder %s14, 0
      %p95 = por %p93, %p94
      %p96 = scmp.ne.s32.totalorder %s88, %s90
      %p97 = scmp.eq.s32.totalorder %s19, 1
      %p98 = por %p96, %p97
      %p99 = scmp.ne.s32.totalorder %s90, %s91
      %p100 = scmp.eq.s32.totalorder %s19, 0
      %p101 = por %p99, %p100
      %p102 = scmp.ne.s32.totalorder %s90, %s91
      %p103 = scmp.eq.s32.totalorder %s20, 1
      %p104 = por %p102, %p103
      %p106 = scmp.ne.s32.totalorder %s91, %s105
      %p107 = scmp.eq.s32.totalorder %s20, 0
      %p108 = por %p106, %p107
      %s110 = sadd.s32 %s109, 1
      %p113 = scmp.eq.s32.totalorder %s14, 1
      %p114 = scmp.ne.s32.totalorder %s109, %s111
      %p115 = scmp.eq.s32.totalorder %s14, 0
      %p116 = por %p114, %p115
      %p117 = scmp.ne.s32.totalorder %s109, %s111
      %p118 = scmp.eq.s32.totalorder %s19, 1
      %p119 = por %p117, %p118
      %p120 = scmp.ne.s32.totalorder %s111, %s112
      %p121 = scmp.eq.s32.totalorder %s19, 0
      %p122 = por %p120, %p121
      %p123 = scmp.ne.s32.totalorder %s111, %s112
      %p124 = scmp.eq.s32.totalorder %s20, 1
      %p125 = por %p123, %p124
      %p127 = scmp.ne.s32.totalorder %s112, %s126
      %p128 = scmp.eq.s32.totalorder %s20, 0
      %p129 = por %p127, %p128
      %s130 = ssub.s32 %s21, %s33
      %s131 = ssub.s32 %s22, %s29
      %s132 = sor.u32 %s130, %s131
      %p133 = scmp.eq.s32.totalorder %s132, 0
      %s135 = sadd.s32 %s134, 1
      %s136 = scalar_select %p133, %s134, %s135
      %p139 = pneg %p133
      %p140 = scmp.eq.s32.totalorder %s14, 1
      %p141 = por %p139, %p140
      %p142 = scmp.ne.s32.totalorder %s134, %s137
      %p143 = scmp.eq.s32.totalorder %s14, 0
      %p144 = por %p142, %p143
      %p145 = scmp.ne.s32.totalorder %s134, %s137
      %p146 = scmp.eq.s32.totalorder %s19, 1
      %p147 = por %p145, %p146
      %p148 = scmp.ne.s32.totalorder %s137, %s138
      %p149 = scmp.eq.s32.totalorder %s19, 0
      %p150 = por %p148, %p149
      %p151 = scmp.ne.s32.totalorder %s137, %s138
      %p152 = scmp.eq.s32.totalorder %s20, 1
      %p153 = por %p151, %p152
      %p155 = scmp.ne.s32.totalorder %s138, %s154
      %p156 = scmp.eq.s32.totalorder %s20, 0
      %p157 = por %p155, %p156
      %p158 = scmp.le.s32.totalorder 1, %s14
      %p159 = scmp.lt.s32.totalorder %s14, 3
      %p160 = pnand %p158, %p159
      %p161 = pneg %p160
      // Predicated region
      $region9: #{tpu_custom_call.1} parent=5 // pred_check
        _
      $region10: #{tpu_custom_call.1} parent=5 // pred_check_branch
        %163 = sbr.rel (%p160) target = $region12
      $region11: #{tpu_custom_call.1} parent=5 // pred_region
        %s164 = ssub.s32 %s14, 1
        // Predicated region
        $region13: #{tpu_custom_call.1} parent=11 // pred_check
          %p165 = pneg %p101
        $region14: #{tpu_custom_call.1} parent=11 // pred_check_branch
          %167 = sbr.rel (%p165) target = $region16
        $region15: #{tpu_custom_call.1} parent=11 // pred_region
          %169 = vsyncadd [#allocation3], 0
          %s170 = sshll.u32 %s2, 4
          %s171 = int_to_ptr.hbm [resolvable:$true] %s170
          %s172 = sshll.u32 [#allocation2], 4
          %s173 = int_to_ptr.vmem [resolvable:$true] %s172
          %178 = dma.hbm_to_vmem [thread:$0]  %s171, 256, %s173, [#allocation3], 64, 64, 4
        $region16: #{tpu_custom_call.1} parent=11 // pred_fallthru
          _
        // Predicated region
        $region17: #{tpu_custom_call.1} parent=11 // pred_check
          %p179 = pneg %p122
        $region18: #{tpu_custom_call.1} parent=11 // pred_check_branch
          %181 = sbr.rel (%p179) target = $region20
        $region19: #{tpu_custom_call.1} parent=11 // pred_region
          _
        $region20: #{tpu_custom_call.1} parent=11 // pred_fallthru
          _
      $region12: #{tpu_custom_call.1} parent=5 // pred_fallthru
        _
      %p182 = scmp.lt.s32.totalorder %s14, 2
      // Predicated region
      $region21: #{tpu_custom_call.1} parent=5 // pred_check
        %p183 = pneg %p182
      $region22: #{tpu_custom_call.1} parent=5 // pred_check_branch
        %185 = sbr.rel (%p183) target = $region24
      $region23: #{tpu_custom_call.1} parent=5 // pred_region
        // Predicated region
        $region25: #{tpu_custom_call.1} parent=23 // pred_check
          %p186 = pneg %p48
        $region26: #{tpu_custom_call.1} parent=23 // pred_check_branch
          %188 = sbr.rel (%p186) target = $region28
        $region27: #{tpu_custom_call.1} parent=23 // pred_region
          %p189 = scmp.lt.s32.totalorder %s21, 1
          %s190 = scalar_select %p189, %s21, 1
          %p191 = scmp.lt.s32.totalorder %s22, 0
          %s192 = scalar_select %p191, %s22, 0
          %s193 = sadd.s32 %s192, %s190
          %s194 = smul.addr %s193, 8
          %s195 = scalar_lea.vmem %s0, %s194
        $region28: #{tpu_custom_call.1} parent=23 // pred_fallthru
          _
        // Predicated region
        $region29: #{tpu_custom_call.1} parent=23 // pred_check
          %p196 = pneg %p74
        $region30: #{tpu_custom_call.1} parent=23 // pred_check_branch
          %198 = sbr.rel (%p196) target = $region32
        $region31: #{tpu_custom_call.1} parent=23 // pred_region
          %p199 = scmp.lt.s32.totalorder %s21, 1
          %s200 = scalar_select %p199, %s21, 1
          %s201 = smul.addr %s200, 8
          %s202 = scalar_lea.vmem %s1, %s201
        $region32: #{tpu_custom_call.1} parent=23 // pred_fallthru
          _
      $region24: #{tpu_custom_call.1} parent=5 // pred_fallthru
        _
      %p203 = scmp.le.s32.totalorder 1, %s14
      %p204 = scmp.lt.s32.totalorder %s14, 3
      %p205 = pnand %p203, %p204
      %p206 = pneg %p205
      // Predicated region
      $region33: #{tpu_custom_call.1} parent=5 // pred_check
        _
      $region34: #{tpu_custom_call.1} parent=5 // pred_check_branch
        %208 = sbr.rel (%p205) target = $region36
      $region35: #{tpu_custom_call.1} parent=5 // pred_region
        %s209 = ssub.s32 %s14, 1
        // Predicated region
        $region37: #{tpu_custom_call.1} parent=35 // pred_check
          %p210 = pneg %p101
        $region38: #{tpu_custom_call.1} parent=35 // pred_check_branch
          %212 = sbr.rel (%p210) target = $region40
        $region39: #{tpu_custom_call.1} parent=35 // pred_region
          %214 = dma.done [#allocation3], 256
        $region40: #{tpu_custom_call.1} parent=35 // pred_fallthru
          _
        %p215 = scmp.lt.s32.totalorder %s23, 1
        %s216 = scalar_select %p215, %s23, 1
        %p217 = scmp.lt.s32.totalorder %s24, 0
        %s218 = scalar_select %p217, %s24, 0
        %s219 = sadd.s32 %s218, %s216
        %s220 = smul.addr %s219, 8
        %s221 = scalar_lea.vmem %s0, %s220
        %p222 = pneg %p54
        %p223 = pneg %p51
        %p224 = scmp.lt.s32.totalorder %s23, 1
        %s225 = scalar_select %p224, %s23, 1
        %s226 = smul.addr %s225, 8
        %s227 = scalar_lea.vmem %s1, %s226
        %p228 = pneg %p80
        %p229 = pneg %p77
        %p230 = pneg %p101
        %p231 = pneg %p98
        %p232 = pneg %p122
        %p233 = pneg %p119
        %p234 = pneg %p150
        %p235 = pneg %p147
        %s236 = sand.u32 %s137, 1
        %s237 = scalar_lea.sflag [#allocation4], %s236
        %s238 = sand.u32 %s137, 1
        %s239 = smul.addr %s238, 4
        %s240 = scalar_lea.vmem [#allocation5], %s239
        %p241 = scmp.lt.s32.totalorder %s23, 1
        %s242 = scalar_select %p241, %s23, 1
        %p243 = scmp.lt.s32.totalorder %s24, 0
        %s244 = scalar_select %p243, %s24, 0
        %s245 = sadd.s32 %s244, %s242
        %s246 = smul.addr %s245, 8
        %s247 = scalar_lea.vmem %s0, %s246
        %p248 = scmp.lt.s32.totalorder %s23, 1
        %s249 = scalar_select %p248, %s23, 1
        %s250 = smul.addr %s249, 8
        %s251 = scalar_lea.vmem %s1, %s250
        %v253 = vld [vmem:[%s247] sm:$0xff]
        %v254 = vld [vmem:[%s251] sm:$0x3f]
        %vm255 = vcmask 261120
        %v256 = vsel %vm255, %v253, 0.0
        %257 = vadd.xlane.f32.xlu0 %v256
        %v258 = vpop.xlane.xlu0 %257
        %v259 = vrcp.pop 32.0
        %v260 = vmul.f32 32.0, %v259
        %v261 = vsub.f32 1.0, %v260
        %v262 = vmul.f32 %v259, %v261
        %v263 = vadd.f32 %v259, %v262
        %vm264 = vweird.f32 %v259
        %v265 = vsel %vm264, %v259, %v263
        %v266 = vmul.f32 %v258, %v265
        %v267 = vsub.f32 %v253, %v266
        %v268 = vmul.f32 %v267, %v267
        %v269 = vsel %vm255, %v268, 0.0
        %270 = vadd.xlane.f32.xlu0 %v269
        %v271 = vpop.xlane.xlu0 %270
        %v272 = vmul.f32 %v271, %v265
        %v273 = vadd.f32 %v272, 1e-06
        %v274 = vrsqrt.pop %v273
        %v275 = vmul.f32 %v274, %v273
        %v276 = vmul.f32 %v275, %v274
        %v277 = vmul.f32 0.5, %v276
        %v278 = vsub.f32 1.5, %v277
        %v279 = vmul.f32 %v274, %v278
        %vm280 = vweird.f32 %v273
        %vm281 = vweird.f32 %v274
        %vm282 = vmor %vm280, %vm281
        %v283 = vsel %vm282, %v274, %v279
        %v284 = vmul.f32 %v267, %v283
        %v285 = vadd.f32 %v254, 1.0
        %v286 = vperm.slane %v285, 1
        %v287 = vmul.f32 %v284, %v286
        %v288 = vperm.slane %v254, 0
        %v289 = vadd.f32 %v287, %v288
        %v290 = vpack.c.bf16 %v289, %v289
        %v291 = vld [vmem:[#allocation2] sm:$0xf]
        %v292 = vld [vmem:[#allocation2 + $0x4] sm:$0xf]
        %v293 = vld [vmem:[#allocation2 + $0x8] sm:$0xf]
        %v294 = vld [vmem:[#allocation2 + $0xc] sm:$0xf]
        %v295 = vld [vmem:[%s3] sm:$0x1]
        %v297 = vperm.slane %v295, 0
        %v303 = vunpack.c.l.b16 %v291
        %v304 = vunpack.c.l.b16 %v292
        %v305 = vunpack.c.l.b16 %v293
        %v306 = vunpack.c.l.b16 %v294
        %v307 = vpack.c.b16 %v304, %v303
        %v308 = vpack.c.b16 %v306, %v305
        %v312 = vsel %vm255, %v290, 0
        %314 = vmatpush.bf16.msra.mxu0 0
        %315 = vmatpush.bf16.msra.mxu0 0
        %316 = vmatpush.bf16.msra.mxu0 0
        %317 = vmatpush.bf16.msra.mxu0 0
        %318 = vmatpush.bf16.msra.mxu0 0
        %319 = vmatpush.bf16.msra.mxu0 0
        %320 = vmatpush.bf16.msra.mxu0 %v308
        %321 = vmatpush.bf16.msra.mxu0 %v307
        %322 = vmatmul.bf16.gmra.mxu0 %v312
        %v323 = vpop.f32.mrf.mxu0
        %v324 = vadd.f32 %v297, %v323
        %v325 = vpop.f32.mrf.mxu0
        %326 = vdwg.mxu0
        %v327 = vpack.c.bf16 %v324, %v324
        %vm328 = vcmask 781312
        %329 = vst.msk [vmem:[%s240] sm:$0xf] %vm328, %v327
        %s330 = sand.u32 %s137, 1
        %s331 = scalar_lea.sflag [#allocation4], %s330
        %s332 = sand.u32 %s137, 1
        %s333 = smul.addr %s332, 4
        %s334 = scalar_lea.vmem [#allocation5], %s333
        // Predicated region
        $region41: #{tpu_custom_call.1} parent=35 // pred_check
          %p335 = pneg %p147
        $region42: #{tpu_custom_call.1} parent=35 // pred_check_branch
          %337 = sbr.rel (%p335) target = $region44
        $region43: #{tpu_custom_call.1} parent=35 // pred_region
          %339 = vsyncadd %s331, 0
          %s340 = sadd.s32 %s24, %s23
          %s341 = smul.addr %s340, 4
          %s342 = scalar_lea.hbm %s4, %s341
          %s344 = sshll.u32 %s334, 4
          %s345 = int_to_ptr.vmem [resolvable:$true] %s344
          %s346 = sshll.u32 %s342, 4
          %s347 = int_to_ptr.hbm [resolvable:$true] %s346
          %349 = dma.vmem_to_hbm [thread:$0]  %s345, 64, %s347, %s331
        $region44: #{tpu_custom_call.1} parent=35 // pred_fallthru
          _
      $region36: #{tpu_custom_call.1} parent=5 // pred_fallthru
        _
      %p350 = scmp.le.s32.totalorder 2, %s14
      // Predicated region
      $region45: #{tpu_custom_call.1} parent=5 // pred_check
        %p351 = pneg %p350
      $region46: #{tpu_custom_call.1} parent=5 // pred_check_branch
        %353 = sbr.rel (%p351) target = $region48
      $region47: #{tpu_custom_call.1} parent=5 // pred_region
        %s354 = ssub.s32 %s14, 2
        // Predicated region
        $region49: #{tpu_custom_call.1} parent=47 // pred_check
          %p355 = pneg %p153
        $region50: #{tpu_custom_call.1} parent=47 // pred_check_branch
          %357 = sbr.rel (%p355) target = $region52
        $region51: #{tpu_custom_call.1} parent=47 // pred_region
          %s358 = sand.u32 %s138, 1
          %s359 = scalar_lea.sflag [#allocation4], %s358
          %s360 = sand.u32 %s138, 1
          %s361 = smul.addr %s360, 4
          %s362 = scalar_lea.vmem [#allocation5], %s361
          %364 = dma.done %s359, 64
        $region52: #{tpu_custom_call.1} parent=47 // pred_fallthru
          _
      $region48: #{tpu_custom_call.1} parent=5 // pred_fallthru
        _
    $region6: #{tpu_custom_call.1} parent=1 // loop_footer
      %s18 = sadd.s32 1, %s14
    $region7: #{tpu_custom_call.1} parent=1 // loop_footer_branch
      %13 = sbr.rel target = $region3
    $region8: #{tpu_custom_call.1} parent=1 // loop_exit
      _
    %365 = vsyncpa [#allocation3], 1
    %s366 = scalar_lea.sflag [#allocation3], 1
    %367 = vsyncpa %s366, 1
    %368 = vsyncpa [#allocation4], 1
    %s369 = scalar_lea.sflag [#allocation4], 1
    %370 = vsyncpa %s369, 1

// kernel: tpu_custom_call.1
$region0: #{tpu_custom_call.1}
  #allocation0 [shape = 'u32[]', space=smem, size = 0x4, offset = 0x4, fixed_abs, tag = 'smem constant byte address 0x4 - core index']
  #allocation1 [shape = 'u32[72,128]{1,0:T(1,128)}', space=vmem, size = 0x9000, scoped, tag = 'internal scratch']
  %s0 = inlined_call_operand.vmem [shape: f32[2,8,32], index: 0, kind: input, shape index: {}]
  %s1 = inlined_call_operand.vmem [shape: f32[2,6,32], index: 1, kind: input, shape index: {}]
  %s2 = inlined_call_operand.hbm [shape: bf16[32,96], index: 2, kind: input, shape index: {}]
  %s3 = inlined_call_operand.vmem [shape: f32[1,96], index: 3, kind: input, shape index: {}]
  %s4 = inlined_call_operand.hbm [shape: bf16[2,8,96], index: 4, kind: output, shape index: {}]
  %s5 = sld [smem:[#allocation0]]
  $region53: #{tpu_custom_call.1} parent=0
    _
  %s7 = ssub.s32 1, %s5
  %s8 = scalar_select 0, %s7, %s5
  $region1: #{tpu_custom_call.1} parent=0
    #allocation2 [shape = 'u8[8192]{0}', space=vmem, size = 0x2000, scoped, tag = 'input window, operand 2, single buffered']
    #allocation3 [shape = 's32[2]{0}', space=sflag, size = 0x8, scoped, tag = 'scoped memory for tpu_custom_call.1']
    #allocation4 [shape = 's32[2]{0}', space=sflag, size = 0x8, scoped, tag = 'scoped memory for tpu_custom_call.1']
    #allocation5 [shape = 'u8[4096]{0}', space=vmem, size = 0x1000, scoped, tag = 'output window, operand 0']
    %9 = vsyncpa [#allocation3], 0
    %10 = vsyncpa [#allocation4], 0
    %s11 = scalar_lea.sflag [#allocation4], 1
    %12 = vsyncpa %s11, 0
    loop: start=0, step=1, limit=4
    $region2: #{tpu_custom_call.1} parent=1 // loop_pre_header
      _
    $region3: #{tpu_custom_call.1} parent=1 // loop_header
      %s14 = sphi 0, %s18
      %p15 = scmp.ge.s32.totalorder %s14, 4
      %s21 = sphi 0, %s33
      %s22 = sphi 0, %s29
      %s23 = sphi 0, %s21
      %s24 = sphi 0, %s22
      %s25 = sphi 0, %s23
      %s26 = sphi 0, %s24
      %s38 = sphi 0, %s40
      %s41 = sphi 0, %s38
      %s42 = sphi 0, %s41
      %s58 = sphi 0, %s42
      %s64 = sphi 0, %s66
      %s67 = sphi 0, %s64
      %s68 = sphi 0, %s67
      %s84 = sphi 0, %s68
      %s88 = sphi 0, %s88
      %s90 = sphi 0, %s88
      %s91 = sphi 0, %s90
      %s105 = sphi 0, %s91
      %s109 = sphi 0, %s109
      %s111 = sphi 0, %s109
      %s112 = sphi 0, %s111
      %s126 = sphi 0, %s112
      %s134 = sphi 0, %s136
      %s137 = sphi 0, %s134
      %s138 = sphi 0, %s137
      %s154 = sphi 0, %s138
    $region4: #{tpu_custom_call.1} parent=1 // loop_header_branch
      %17 = sbr.rel (%p15) target = $region8
    $region5: #{tpu_custom_call.1} parent=1 // loop_body
      %s19 = ssub.s32 %s14, 1
      %s20 = ssub.s32 %s14, 2
      %s27 = sadd.s32 1, %s22
      %p28 = scmp.ge.s32.totalorder %s27, 1
      %s29 = scalar_select %p28, 0, %s27
      %s30 = sadd.s32 1, %s21
      %s31 = scalar_select %p28, %s30, %s21
      %p32 = scmp.ge.s32.totalorder %s31, 2
      %s33 = scalar_select %p32, 0, %s31
      %s34 = ssub.s32 %s21, %s33
      %s35 = ssub.s32 %s22, %s29
      %s36 = sor.u32 %s34, %s35
      %p37 = scmp.eq.s32.totalorder %s36, 0
      %s39 = sadd.s32 %s38, 1
      %s40 = scalar_select %p37, %s38, %s39
      %p43 = pneg %p37
      %p44 = scmp.eq.s32.totalorder %s14, 1
      %p45 = por %p43, %p44
      %p46 = scmp.ne.s32.totalorder %s38, %s41
      %p47 = scmp.eq.s32.totalorder %s14, 0
      %p48 = por %p46, %p47
      %p49 = scmp.ne.s32.totalorder %s38, %s41
      %p50 = scmp.eq.s32.totalorder %s19, 1
      %p51 = por %p49, %p50
      %p52 = scmp.ne.s32.totalorder %s41, %s42
      %p53 = scmp.eq.s32.totalorder %s19, 0
      %p54 = por %p52, %p53
      %p55 = scmp.ne.s32.totalorder %s41, %s42
      %p56 = scmp.eq.s32.totalorder %s20, 1
      %p57 = por %p55, %p56
      %p59 = scmp.ne.s32.totalorder %s42, %s58
      %p60 = scmp.eq.s32.totalorder %s20, 0
      %p61 = por %p59, %p60
      %s62 = ssub.s32 %s21, %s33
      %p63 = scmp.eq.s32.totalorder %s62, 0
      %s65 = sadd.s32 %s64, 1
      %s66 = scalar_select %p63, %s64, %s65
      %p69 = pneg %p63
      %p70 = scmp.eq.s32.totalorder %s14, 1
      %p71 = por %p69, %p70
      %p72 = scmp.ne.s32.totalorder %s64, %s67
      %p73 = scmp.eq.s32.totalorder %s14, 0
      %p74 = por %p72, %p73
      %p75 = scmp.ne.s32.totalorder %s64, %s67
      %p76 = scmp.eq.s32.totalorder %s19, 1
      %p77 = por %p75, %p76
      %p78 = scmp.ne.s32.totalorder %s67, %s68
      %p79 = scmp.eq.s32.totalorder %s19, 0
      %p80 = por %p78, %p79
      %p81 = scmp.ne.s32.totalorder %s67, %s68
      %p82 = scmp.eq.s32.totalorder %s20, 1
      %p83 = por %p81, %p82
      %p85 = scmp.ne.s32.totalorder %s68, %s84
      %p86 = scmp.eq.s32.totalorder %s20, 0
      %p87 = por %p85, %p86
      %s89 = sadd.s32 %s88, 1
      %p92 = scmp.eq.s32.totalorder %s14, 1
      %p93 = scmp.ne.s32.totalorder %s88, %s90
      %p94 = scmp.eq.s32.totalorder %s14, 0
      %p95 = por %p93, %p94
      %p96 = scmp.ne.s32.totalorder %s88, %s90
      %p97 = scmp.eq.s32.totalorder %s19, 1
      %p98 = por %p96, %p97
      %p99 = scmp.ne.s32.totalorder %s90, %s91
      %p100 = scmp.eq.s32.totalorder %s19, 0
      %p101 = por %p99, %p100
      %p102 = scmp.ne.s32.totalorder %s90, %s91
      %p103 = scmp.eq.s32.totalorder %s20, 1
      %p104 = por %p102, %p103
      %p106 = scmp.ne.s32.totalorder %s91, %s105
      %p107 = scmp.eq.s32.totalorder %s20, 0
      %p108 = por %p106, %p107
      %s110 = sadd.s32 %s109, 1
      %p113 = scmp.eq.s32.totalorder %s14, 1
      %p114 = scmp.ne.s32.totalorder %s109, %s111
      %p115 = scmp.eq.s32.totalorder %s14, 0
      %p116 = por %p114, %p115
      %p117 = scmp.ne.s32.totalorder %s109, %s111
      %p118 = scmp.eq.s32.totalorder %s19, 1
      %p119 = por %p117, %p118
      %p120 = scmp.ne.s32.totalorder %s111, %s112
      %p121 = scmp.eq.s32.totalorder %s19, 0
      %p122 = por %p120, %p121
      %p123 = scmp.ne.s32.totalorder %s111, %s112
      %p124 = scmp.eq.s32.totalorder %s20, 1
      %p125 = por %p123, %p124
      %p127 = scmp.ne.s32.totalorder %s112, %s126
      %p128 = scmp.eq.s32.totalorder %s20, 0
      %p129 = por %p127, %p128
      %s130 = ssub.s32 %s21, %s33
      %s131 = ssub.s32 %s22, %s29
      %s132 = sor.u32 %s130, %s131
      %p133 = scmp.eq.s32.totalorder %s132, 0
      %s135 = sadd.s32 %s134, 1
      %s136 = scalar_select %p133, %s134, %s135
      %p139 = pneg %p133
      %p140 = scmp.eq.s32.totalorder %s14, 1
      %p141 = por %p139, %p140
      %p142 = scmp.ne.s32.totalorder %s134, %s137
      %p143 = scmp.eq.s32.totalorder %s14, 0
      %p144 = por %p142, %p143
      %p145 = scmp.ne.s32.totalorder %s134, %s137
      %p146 = scmp.eq.s32.totalorder %s19, 1
      %p147 = por %p145, %p146
      %p148 = scmp.ne.s32.totalorder %s137, %s138
      %p149 = scmp.eq.s32.totalorder %s19, 0
      %p150 = por %p148, %p149
      %p151 = scmp.ne.s32.totalorder %s137, %s138
      %p152 = scmp.eq.s32.totalorder %s20, 1
      %p153 = por %p151, %p152
      %p155 = scmp.ne.s32.totalorder %s138, %s154
      %p156 = scmp.eq.s32.totalorder %s20, 0
      %p157 = por %p155, %p156
      %p158 = scmp.le.s32.totalorder 1, %s14
      %p159 = scmp.lt.s32.totalorder %s14, 3
      %p160 = pnand %p158, %p159
      %p161 = pneg %p160
      // Predicated region
      $region9: #{tpu_custom_call.1} parent=5 // pred_check
        _
      $region10: #{tpu_custom_call.1} parent=5 // pred_check_branch
        %163 = sbr.rel (%p160) target = $region12
      $region11: #{tpu_custom_call.1} parent=5 // pred_region
        %s164 = ssub.s32 %s14, 1
        // Predicated region
        $region13: #{tpu_custom_call.1} parent=11 // pred_check
          %p165 = pneg %p101
        $region14: #{tpu_custom_call.1} parent=11 // pred_check_branch
          %167 = sbr.rel (%p165) target = $region16
        $region15: #{tpu_custom_call.1} parent=11 // pred_region
          %169 = vsyncadd [#allocation3], 0
          %s170 = sshll.u32 %s2, 4
          %s171 = int_to_ptr.hbm [resolvable:$true] %s170
          %s172 = sshll.u32 [#allocation2], 4
          %s173 = int_to_ptr.vmem [resolvable:$true] %s172
          %178 = dma.hbm_to_vmem [thread:$0]  %s171, 256, %s173, [#allocation3], 64, 64, 4
        $region16: #{tpu_custom_call.1} parent=11 // pred_fallthru
          _
        // Predicated region
        $region17: #{tpu_custom_call.1} parent=11 // pred_check
          %p179 = pneg %p122
        $region18: #{tpu_custom_call.1} parent=11 // pred_check_branch
          %181 = sbr.rel (%p179) target = $region20
        $region19: #{tpu_custom_call.1} parent=11 // pred_region
          _
        $region20: #{tpu_custom_call.1} parent=11 // pred_fallthru
          _
      $region12: #{tpu_custom_call.1} parent=5 // pred_fallthru
        _
      %p182 = scmp.lt.s32.totalorder %s14, 2
      // Predicated region
      $region21: #{tpu_custom_call.1} parent=5 // pred_check
        %p183 = pneg %p182
      $region22: #{tpu_custom_call.1} parent=5 // pred_check_branch
        %185 = sbr.rel (%p183) target = $region24
      $region23: #{tpu_custom_call.1} parent=5 // pred_region
        // Predicated region
        $region25: #{tpu_custom_call.1} parent=23 // pred_check
          %p186 = pneg %p48
        $region26: #{tpu_custom_call.1} parent=23 // pred_check_branch
          %188 = sbr.rel (%p186) target = $region28
        $region27: #{tpu_custom_call.1} parent=23 // pred_region
          %p189 = scmp.lt.s32.totalorder %s21, 1
          %s190 = scalar_select %p189, %s21, 1
          %p191 = scmp.lt.s32.totalorder %s22, 0
          %s192 = scalar_select %p191, %s22, 0
          %s193 = sadd.s32 %s192, %s190
          %s194 = smul.addr %s193, 8
          %s195 = scalar_lea.vmem %s0, %s194
        $region28: #{tpu_custom_call.1} parent=23 // pred_fallthru
          _
        // Predicated region
        $region29: #{tpu_custom_call.1} parent=23 // pred_check
          %p196 = pneg %p74
        $region30: #{tpu_custom_call.1} parent=23 // pred_check_branch
          %198 = sbr.rel (%p196) target = $region32
        $region31: #{tpu_custom_call.1} parent=23 // pred_region
          %p199 = scmp.lt.s32.totalorder %s21, 1
          %s200 = scalar_select %p199, %s21, 1
          %s201 = smul.addr %s200, 8
          %s202 = scalar_lea.vmem %s1, %s201
        $region32: #{tpu_custom_call.1} parent=23 // pred_fallthru
          _
      $region24: #{tpu_custom_call.1} parent=5 // pred_fallthru
        _
      %p203 = scmp.le.s32.totalorder 1, %s14
      %p204 = scmp.lt.s32.totalorder %s14, 3
      %p205 = pnand %p203, %p204
      %p206 = pneg %p205
      // Predicated region
      $region33: #{tpu_custom_call.1} parent=5 // pred_check
        _
      $region34: #{tpu_custom_call.1} parent=5 // pred_check_branch
        %208 = sbr.rel (%p205) target = $region36
      $region35: #{tpu_custom_call.1} parent=5 // pred_region
        %s209 = ssub.s32 %s14, 1
        // Predicated region
        $region37: #{tpu_custom_call.1} parent=35 // pred_check
          %p210 = pneg %p101
        $region38: #{tpu_custom_call.1} parent=35 // pred_check_branch
          %212 = sbr.rel (%p210) target = $region40
        $region39: #{tpu_custom_call.1} parent=35 // pred_region
          %214 = dma.done [#allocation3], 256
        $region40: #{tpu_custom_call.1} parent=35 // pred_fallthru
          _
        %p215 = scmp.lt.s32.totalorder %s23, 1
        %s216 = scalar_select %p215, %s23, 1
        %p217 = scmp.lt.s32.totalorder %s24, 0
        %s218 = scalar_select %p217, %s24, 0
        %s219 = sadd.s32 %s218, %s216
        %s220 = smul.addr %s219, 8
        %s221 = scalar_lea.vmem %s0, %s220
        %p222 = pneg %p54
        %p223 = pneg %p51
        %p224 = scmp.lt.s32.totalorder %s23, 1
        %s225 = scalar_select %p224, %s23, 1
        %s226 = smul.addr %s225, 8
        %s227 = scalar_lea.vmem %s1, %s226
        %p228 = pneg %p80
        %p229 = pneg %p77
        %p230 = pneg %p101
        %p231 = pneg %p98
        %p232 = pneg %p122
        %p233 = pneg %p119
        %p234 = pneg %p150
        %p235 = pneg %p147
        %s236 = sand.u32 %s137, 1
        %s237 = scalar_lea.sflag [#allocation4], %s236
        %s238 = sand.u32 %s137, 1
        %s239 = smul.addr %s238, 4
        %s240 = scalar_lea.vmem [#allocation5], %s239
        %p241 = scmp.lt.s32.totalorder %s23, 1
        %s242 = scalar_select %p241, %s23, 1
        %p243 = scmp.lt.s32.totalorder %s24, 0
        %s244 = scalar_select %p243, %s24, 0
        %s245 = sadd.s32 %s244, %s242
        %s246 = smul.addr %s245, 8
        %s247 = scalar_lea.vmem %s0, %s246
        %p248 = scmp.lt.s32.totalorder %s23, 1
        %s249 = scalar_select %p248, %s23, 1
        %s250 = smul.addr %s249, 8
        %s251 = scalar_lea.vmem %s1, %s250
        %v253 = vld [vmem:[%s247] sm:$0xff]
        %v254 = vld [vmem:[%s251] sm:$0x3f]
        %vm255 = vcmask 261120
        %v256 = vsel %vm255, %v253, 0.0
        %257 = vadd.xlane.f32.xlu0 %v256
        %v258 = vpop.xlane.xlu0 %257
        %v259 = vrcp.pop 32.0
        %v260 = vmul.f32 32.0, %v259
        %v261 = vsub.f32 1.0, %v260
        %v262 = vmul.f32 %v259, %v261
        %v263 = vadd.f32 %v259, %v262
        %vm264 = vweird.f32 %v259
        %v265 = vsel %vm264, %v259, %v263
        %v266 = vmul.f32 %v258, %v265
        %v267 = vsub.f32 %v253, %v266
        %v268 = vmul.f32 %v267, %v267
        %v269 = vsel %vm255, %v268, 0.0
        %270 = vadd.xlane.f32.xlu0 %v269
        %v271 = vpop.xlane.xlu0 %270
        %v272 = vmul.f32 %v271, %v265
        %v273 = vadd.f32 %v272, 1e-06
        %v274 = vrsqrt.pop %v273
        %v275 = vmul.f32 %v274, %v273
        %v276 = vmul.f32 %v275, %v274
        %v277 = vmul.f32 0.5, %v276
        %v278 = vsub.f32 1.5, %v277
        %v279 = vmul.f32 %v274, %v278
        %vm280 = vweird.f32 %v273
        %vm281 = vweird.f32 %v274
        %vm282 = vmor %vm280, %vm281
        %v283 = vsel %vm282, %v274, %v279
        %v284 = vmul.f32 %v267, %v283
        %v285 = vadd.f32 %v254, 1.0
        %v286 = vperm.slane %v285, 1
        %v287 = vmul.f32 %v284, %v286
        %v288 = vperm.slane %v254, 0
        %v289 = vadd.f32 %v287, %v288
        %v290 = vpack.c.bf16 %v289, %v289
        %v291 = vld [vmem:[#allocation2] sm:$0xf]
        %v292 = vld [vmem:[#allocation2 + $0x4] sm:$0xf]
        %v293 = vld [vmem:[#allocation2 + $0x8] sm:$0xf]
        %v294 = vld [vmem:[#allocation2 + $0xc] sm:$0xf]
        %v295 = vld [vmem:[%s3] sm:$0x1]
        %v297 = vperm.slane %v295, 0
        %v303 = vunpack.c.l.b16 %v291
        %v304 = vunpack.c.l.b16 %v292
        %v305 = vunpack.c.l.b16 %v293
        %v306 = vunpack.c.l.b16 %v294
        %v307 = vpack.c.b16 %v304, %v303
        %v308 = vpack.c.b16 %v306, %v305
        %v312 = vsel %vm255, %v290, 0
        %314 = vmatpush.bf16.msra.mxu0 0
        %315 = vmatpush.bf16.msra.mxu0 0
        %316 = vmatpush.bf16.msra.mxu0 0
        %317 = vmatpush.bf16.msra.mxu0 0
        %318 = vmatpush.bf16.msra.mxu0 0
        %319 = vmatpush.bf16.msra.mxu0 0
        %320 = vmatpush.bf16.msra.mxu0 %v308
        %321 = vmatpush.bf16.msra.mxu0 %v307
        %322 = vmatmul.bf16.gmra.mxu0 %v312
        %v323 = vpop.f32.mrf.mxu0
        %v324 = vadd.f32 %v297, %v323
        %v325 = vpop.f32.mrf.mxu0
        %326 = vdwg.mxu0
        %v327 = vpack.c.bf16 %v324, %v324
        %vm328 = vcmask 781312
        %329 = vst.msk [vmem:[%s240] sm:$0xf] %vm328, %v327
        %s330 = sand.u32 %s137, 1
        %s331 = scalar_lea.sflag [#allocation4], %s330
        %s332 = sand.u32 %s137, 1
        %s333 = smul.addr %s332, 4
        %s334 = scalar_lea.vmem [#allocation5], %s333
        // Predicated region
        $region41: #{tpu_custom_call.1} parent=35 // pred_check
          %p335 = pneg %p147
        $region42: #{tpu_custom_call.1} parent=35 // pred_check_branch
          %337 = sbr.rel (%p335) target = $region44
        $region43: #{tpu_custom_call.1} parent=35 // pred_region
          %339 = vsyncadd %s331, 0
          %s340 = sadd.s32 %s24, %s23
          %s341 = smul.addr %s340, 4
          %s342 = scalar_lea.hbm %s4, %s341
          %s344 = sshll.u32 %s334, 4
          %s345 = int_to_ptr.vmem [resolvable:$true] %s344
          %s346 = sshll.u32 %s342, 4
          %s347 = int_to_ptr.hbm [resolvable:$true] %s346
          %349 = dma.vmem_to_hbm [thread:$0]  %s345, 64, %s347, %s331
        $region44: #{tpu_custom_call.1} parent=35 // pred_fallthru
          _
      $region36: #{tpu_custom_call.1} parent=5 // pred_fallthru
        _
      %p350 = scmp.le.s32.totalorder 2, %s14
      // Predicated region
      $region45: #{tpu_custom_call.1} parent=5 // pred_check
        %p351 = pneg %p350
      $region46: #{tpu_custom_call.1} parent=5 // pred_check_branch
        %353 = sbr.rel (%p351) target = $region48
      $region47: #{tpu_custom_call.1} parent=5 // pred_region
        %s354 = ssub.s32 %s14, 2
        // Predicated region
        $region49: #{tpu_custom_call.1} parent=47 // pred_check
          %p355 = pneg %p153
        $region50: #{tpu_custom_call.1} parent=47 // pred_check_branch
          %357 = sbr.rel (%p355) target = $region52
        $region51: #{tpu_custom_call.1} parent=47 // pred_region
          %s358 = sand.u32 %s138, 1
          %s359 = scalar_lea.sflag [#allocation4], %s358
          %s360 = sand.u32 %s138, 1
          %s361 = smul.addr %s360, 4
          %s362 = scalar_lea.vmem [#allocation5], %s361
          %364 = dma.done %s359, 64
        $region52: #{tpu_custom_call.1} parent=47 // pred_fallthru
          _
      $region48: #{tpu_custom_call.1} parent=5 // pred_fallthru
        _
    $region6: #{tpu_custom_call.1} parent=1 // loop_footer
      %s18 = sadd.s32 1, %s14
    $region7: #{tpu_custom_call.1} parent=1 // loop_footer_branch
      %13 = sbr.rel target = $region3
    $region8: #{tpu_custom_call.1} parent=1 // loop_exit
      _
    %365 = vsyncpa [#allocation3], 1
    %s366 = scalar_lea.sflag [#allocation3], 1
    %367 = vsyncpa %s366, 1
    %368 = vsyncpa [#allocation4], 1
    %s369 = scalar_lea.sflag [#allocation4], 1
    %370 = vsyncpa %s369, 1

</llo_original>
